<compile_context>
chip_gen: v6e
topology: v6e:2x2x1
jax: 0.10.0
libtpu: 0.0.40
codegen_flags: <defaults>
</compile_context>

<pallas_src>
import functools

import jax
import jax.numpy as jnp
from jax.experimental import pallas as pl
from jax.experimental.pallas import tpu as pltpu


LANE = 128                    # TPU lane width: hidden/output feature dim padded to this
_GRIDLESS_MAX = 256           # <= this many rows: one gridless, fully VMEM-resident call
_BATCH_TILE = 512             # rows per grid step on the batch-tiled path
_VMEM_LIMIT_BYTES = 32 * 1024 * 1024  # explicit scoped-VMEM budget for the tiled path
                                      # (v5e default 16 MiB; v6e/v7x default 32 MiB)


def _round_up(n, m):
    return n + (-n) % m


def _place(w, shape, col_off=0):
    """Embed `w` into zeros of `shape` at row 0 / column `col_off` (one-time prep)."""
    out = jnp.zeros(shape, w.dtype)
    return out.at[: w.shape[0], col_off: col_off + w.shape[1]].set(w)


def _sigmoid(y):
    # exp and the approximate reciprocal both ride the EUP slot (the kernel is
    # HBM-bound, so this is effectively free).  The clip guards exp overflow
    # for saturated logits; exact sigmoid is within ~1e-13 of 0/1 at |y|=30.
    y = jnp.clip(y, -30.0, 30.0)
    return pl.reciprocal(1.0 + jnp.exp(-y), approx=True)


# ----------------------------------------------------------------------------
# Fused kernels: one pallas_call = full error_pred forward, single packed
# output tile: lanes [0, H) = hidden, lanes [H, H+4) = sigmoid logits, rest 0.
# ----------------------------------------------------------------------------
def _course_kernel(x_ref, w1_ref, b1_ref, w2_ref, b2_ref, out_ref, *, h, n_out):
    # hidden = ReLU(x @ W1 + b1); padded lanes [h, Hpad) are exactly ReLU(0)=0.
    hid = jnp.dot(x_ref[...], w1_ref[...], preferred_element_type=jnp.float32)
    hid = jnp.maximum(hid + b1_ref[...], 0.0)
    # W2/b2 columns were pre-placed at lane offset h, so the 4 logits land in
    # lanes [h, h+4) straight out of the MXU.
    y = jnp.dot(hid, w2_ref[...], preferred_element_type=jnp.float32) + b2_ref[...]
    lane = jax.lax.broadcasted_iota(jnp.int32, y.shape, 1)
    logit_lane = (lane >= h) & (lane < h + n_out)
    out_ref[...] = jnp.where(logit_lane, _sigmoid(y), hid).astype(out_ref.dtype)


def _fine_kernel(x_ref, c_ref, w1_ref, b1_ref, w3a_ref, w3b_ref, b3_ref, out_ref,
                 *, h, n_out):
    hid = jnp.dot(x_ref[...], w1_ref[...], preferred_element_type=jnp.float32)
    hid = jnp.maximum(hid + b1_ref[...], 0.0)
    # cat((hidden, course_hid)) @ W3  ==  hidden @ W3a + course_hid @ W3b
    y = (jnp.dot(hid, w3a_ref[...], preferred_element_type=jnp.float32)
         + jnp.dot(c_ref[...], w3b_ref[...], preferred_element_type=jnp.float32)
         + b3_ref[...])
    lane = jax.lax.broadcasted_iota(jnp.int32, y.shape, 1)
    logit_lane = (lane >= h) & (lane < h + n_out)
    out_ref[...] = jnp.where(logit_lane, _sigmoid(y), hid).astype(out_ref.dtype)


# ----------------------------------------------------------------------------
# Dispatch wrapper: gridless for small batches, batch-tiled grid otherwise.
# Row inputs (x, course_hid) are tiled over batch; weights/biases stay resident.
# ----------------------------------------------------------------------------
def _fused_call(kernel, row_inputs, resident_inputs, hpad):
    batch = row_inputs[0].shape[0]
    out_shape = jax.ShapeDtypeStruct((batch, hpad), jnp.float32)

    if batch <= _GRIDLESS_MAX:
        vmem = pl.BlockSpec(memory_space=pltpu.MemorySpace.VMEM)
        return pl.pallas_call(
            kernel,
            out_shape=out_shape,
            in_specs=[vmem] * (len(row_inputs) + len(resident_inputs)),
            out_specs=vmem,
        )(*row_inputs, *resident_inputs)

    # Batch-tiled path.  No host-side padding of the row inputs: grid is
    # cdiv(batch, tb) and Pallas masks the ragged last block (all ops are
    # row-independent, so garbage rows only land in output rows nobody reads).
    # tb is chosen so the grid always has >= 2 steps, letting the "parallel"
    # axis shard tiles across both v7x TensorCores (megacore on v6e).
    tb = _BATCH_TILE if batch > 2 * _GRIDLESS_MAX else _GRIDLESS_MAX
    grid = (pl.cdiv(batch, tb),)
    row_specs = [pl.BlockSpec((tb, r.shape[1]), lambda i: (i, 0)) for r in row_inputs]
    # Resident weights/biases: constant index_map -> fetched once per call.
    # (pipeline_mode=pl.Buffered(1) would reclaim their second buffer, but at
    #  tb=512 there is ample VMEM headroom, so it is omitted for portability.)
    res_specs = [pl.BlockSpec(r.shape, lambda i: (0, 0)) for r in resident_inputs]
    return pl.pallas_call(
        kernel,
        out_shape=out_shape,
        grid=grid,
        in_specs=row_specs + res_specs,
        out_specs=pl.BlockSpec((tb, hpad), lambda i: (i, 0)),
        compiler_params=pltpu.CompilerParams(
            dimension_semantics=("parallel",),
            vmem_limit_bytes=_VMEM_LIMIT_BYTES),
    )(*row_inputs, *resident_inputs)


# ----------------------------------------------------------------------------
# Parameters: torch-faithful init, then a one-time packed/padded kernel layout.
# ----------------------------------------------------------------------------
def _xavier_uniform(key, fan_in, fan_out):
    bound = jnp.sqrt(6.0 / (fan_in + fan_out))
    return jax.random.uniform(key, (fan_in, fan_out), jnp.float32, -bound, bound)


def init_params(key, embed_dim, dense_hid_dim):
    k1, k2, k3, k2b, k3b = jax.random.split(key, 5)
    return {
        # dense: xavier_uniform weight, zeros bias (error_pred.reset_parameters)
        "w1": _xavier_uniform(k1, embed_dim, dense_hid_dim),
        "b1": jnp.zeros((dense_hid_dim,), jnp.float32),
        # dense_2 / dense_3: deterministic synthetic init (shapes from __init__)
        "w2": _xavier_uniform(k2, dense_hid_dim, 4),
        "b2": 0.01 * jax.random.normal(k2b, (4,), jnp.float32),
        "w3": _xavier_uniform(k3, dense_hid_dim * 2, 4),
        "b3": 0.01 * jax.random.normal(k3b, (4,), jnp.float32),
    }


def prepare_params(params):
    """One-time transform into the packed layout the kernels expect.

    Layer-2 weights/biases are placed at column offset H so their logits land
    in lanes [H, H+4) of the output tile; all other padding is zeros, so the
    padded hidden lanes stay exactly ReLU(0) = 0 and results are unchanged.
    """
    h = params["b1"].shape[0]
    n_out = params["b2"].shape[0]                     # = 4
    hpad = _round_up(h + n_out, LANE)
    embed = params["w1"].shape[0]
    w3 = params["w3"]                                 # (2H, 4)
    return {
        "h": h, "n_out": n_out, "hpad": hpad,
        "w1": _place(params["w1"], (embed, hpad)),                        # (Fin, Hp)
        "b1": _place(params["b1"].reshape(1, -1), (1, hpad)),             # (1, Hp)
        "w2": _place(params["w2"], (hpad, hpad), col_off=h),              # (Hp, Hp)
        "b2": _place(params["b2"].reshape(1, -1), (1, hpad), col_off=h),  # (1, Hp)
        # dense_3 split: rows [:H] multiply this head's hidden, rows [H:]
        # multiply course_hid.  Two course_hid layouts are supported:
        #   w3b   -- raw (B, H) course_hid       (standalone error_pred API)
        #   w3b_p -- packed (B, Hp) course tile  (chained CEFE_pos path; the
        #            zero rows [H, Hp) kill the packed course logits)
        "w3a": _place(w3[:h], (hpad, hpad), col_off=h),
        "w3b": _place(w3[h:], (h, hpad), col_off=h),
        "w3b_p": _place(w3[h:], (hpad, hpad), col_off=h),
        "b3": _place(params["b3"].reshape(1, -1), (1, hpad), col_off=h),
    }


# ----------------------------------------------------------------------------
# Forward passes
# ----------------------------------------------------------------------------
def error_pred_call(kparams, x, course_hid=None):
    """Run the fused head; returns the packed (B, Hpad) tile:
    lanes [0, H) = hidden, lanes [H, H+4) = sigmoid logits, rest = 0."""
    h, n_out, hpad = kparams["h"], kparams["n_out"], kparams["hpad"]
    if course_hid is None:
        kernel = functools.partial(_course_kernel, h=h, n_out=n_out)
        return _fused_call(
            kernel, [x],
            [kparams["w1"], kparams["b1"], kparams["w2"], kparams["b2"]],
            hpad)
    if course_hid.shape[1] == h:
        w3b = kparams["w3b"]
    elif course_hid.shape[1] == hpad:
        w3b = kparams["w3b_p"]          # packed course tile from a previous head
    else:
        raise ValueError("course_hid must have width H or Hpad")
    kernel = functools.partial(_fine_kernel, h=h, n_out=n_out)
    return _fused_call(
        kernel, [x, course_hid],
        [kparams["w1"], kparams["b1"], kparams["w3a"], w3b, kparams["b3"]],
        hpad)


def error_pred_forward(kparams, x, course_hid=None):
    """torch `error_pred.forward` semantics: returns (out, hidden)."""
    h, n_out = kparams["h"], kparams["n_out"]
    comb = error_pred_call(kparams, x, course_hid)
    out = comb[:, h:h + n_out]                     # single slice per output
    if course_hid is None:
        hidden = comb[:, :h]
    else:
        # module semantics: hidden = cat((dense(x), course_hid), dim=1)
        hidden = jnp.concatenate([comb[:, :h], course_hid[:, :h]], axis=1)
    return out, hidden


def cefe_heads_forward(course_kp, fine_kps, pos_embedding):
    """CEFE_pos prediction-head chain: course_pred -> 4x fine_pred.

    The packed course tile is fed straight into the fine heads (w3b_p path),
    so hidden is never sliced, padded or concatenated on the hot path.
    """
    h, n_out = course_kp["h"], course_kp["n_out"]
    comb_c = error_pred_call(course_kp, pos_embedding, None)
    course_pred = comb_c[:, h:h + n_out]
    fine_preds = []
    for kp_i in fine_kps:
        comb_f = error_pred_call(kp_i, pos_embedding, comb_c)
        fine_preds.append(comb_f[:, kp_i["h"]:kp_i["h"] + kp_i["n_out"]])
    return course_pred, jnp.concatenate(fine_preds, axis=1)


# pure-JAX reference for correctness
def _ref_forward(params, x, course_hid=None):
    hidden = jnp.maximum(x @ params["w1"] + params["b1"], 0.0)
    if course_hid is not None:
        hidden = jnp.concatenate([hidden, course_hid], axis=1)
        out = jax.nn.sigmoid(hidden @ params["w3"] + params["b3"])
    else:
        out = jax.nn.sigmoid(hidden @ params["w2"] + params["b2"])
    return out, hidden


if __name__ == "__main__":
    EMBED_DIM = 32 + 768      # error_pred default embed_dim
    DENSE_HID = 64            # args.dense_hid_dim (exercises the 64 -> 128 packing)
    ATT_HID = 128             # args.att_hid_dim (head input dim inside CEFE_pos)
    BATCH = 8

    key = jax.random.PRNGKey(0)
    keys = jax.random.split(key, 12)
    params = init_params(keys[0], EMBED_DIM, DENSE_HID)
    kparams = prepare_params(params)

    # Matmuls may run at TPU default (bf16-pass) precision in either the kernel
    # or the XLA reference, so compare with bf16-level slack; the approximate
    # reciprocal in the sigmoid adds ~1e-4.  Structural bugs give O(1) errors.
    HID_TOL, OUT_TOL = 3e-2, 1e-2

    x = jax.random.normal(keys[1], (BATCH, EMBED_DIM), jnp.float32)
    course_hid = jax.random.normal(keys[2], (BATCH, DENSE_HID), jnp.float32)

    # small batch -> gridless, fully VMEM-resident fused call
    out1, hid1 = error_pred_forward(kparams, x, None)          # dense_2 path
    out2, hid2 = error_pred_forward(kparams, x, course_hid)    # dense_3 path
    jax.block_until_ready((out1, hid1, out2, hid2))
    r1o, r1h = _ref_forward(params, x, None)
    r2o, r2h = _ref_forward(params, x, course_hid)
    assert out1.shape == (BATCH, 4) and hid1.shape == (BATCH, DENSE_HID)
    assert out2.shape == (BATCH, 4) and hid2.shape == (BATCH, 2 * DENSE_HID)
    assert jnp.allclose(hid1, r1h, atol=HID_TOL)
    assert jnp.allclose(hid2, r2h, atol=HID_TOL)
    assert jnp.allclose(out1, r1o, atol=OUT_TOL)
    assert jnp.allclose(out2, r2o, atol=OUT_TOL)

    # mid-size batch -> 2-step, 256-row-tile grid with a ragged last block
    MID = 300
    xm = jax.random.normal(keys[3], (MID, EMBED_DIM), jnp.float32)
    om, hm = error_pred_forward(kparams, xm, None)
    jax.block_until_ready((om, hm))
    rmo, rmh = _ref_forward(params, xm, None)
    assert om.shape == (MID, 4) and hm.shape == (MID, DENSE_HID)
    assert jnp.allclose(hm, rmh, atol=HID_TOL)
    assert jnp.allclose(om, rmo, atol=OUT_TOL)

    # large, non-tile-multiple batch -> 512-row tiles, ragged last block
    BIG = 1100
    xb = jax.random.normal(keys[4], (BIG, EMBED_DIM), jnp.float32)
    cb = jax.random.normal(keys[5], (BIG, DENSE_HID), jnp.float32)
    ob1, hb1 = error_pred_forward(kparams, xb, None)
    ob2, hb2 = error_pred_forward(kparams, xb, cb)
    jax.block_until_ready((ob1, hb1, ob2, hb2))
    rb1o, rb1h = _ref_forward(params, xb, None)
    rb2o, rb2h = _ref_forward(params, xb, cb)
    assert ob1.shape == (BIG, 4) and hb1.shape == (BIG, DENSE_HID)
    assert ob2.shape == (BIG, 4) and hb2.shape == (BIG, 2 * DENSE_HID)
    assert jnp.allclose(hb1, rb1h, atol=HID_TOL)
    assert jnp.allclose(hb2, rb2h, atol=HID_TOL)
    assert jnp.allclose(ob1, rb1o, atol=OUT_TOL)
    assert jnp.allclose(ob2, rb2o, atol=OUT_TOL)

    # CEFE_pos-style prediction-head chain: course_pred -> 4 fine_pred heads,
    # fine heads consume the packed course tile directly (w3b_p path).
    course_p = init_params(keys[6], ATT_HID, DENSE_HID)
    fine_ps = [init_params(keys[7 + i], ATT_HID, DENSE_HID) for i in range(4)]
    course_kp = prepare_params(course_p)
    fine_kps = [prepare_params(p) for p in fine_ps]
    pos_emb = jax.random.normal(keys[11], (BATCH, ATT_HID), jnp.float32)
    c_out, f_out = cefe_heads_forward(course_kp, fine_kps, pos_emb)
    jax.block_until_ready((c_out, f_out))
    rc, rch = _ref_forward(course_p, pos_emb, None)
    rf = jnp.concatenate([_ref_forward(p, pos_emb, rch)[0] for p in fine_ps], axis=1)
    assert c_out.shape == (BATCH, 4) and f_out.shape == (BATCH, 16)
    assert jnp.allclose(c_out, rc, atol=OUT_TOL)
    assert jnp.allclose(f_out, rf, atol=OUT_TOL)

    print("KERNEL_OK")
</pallas_src>

<mosaic_0001>
module attributes {stable_mosaic.version = 11 : i64} {
  func.func @_course_kernel(%arg0: memref<8x800xf32, #tpu.memory_space<vmem>>, %arg1: memref<800x128xf32, #tpu.memory_space<vmem>>, %arg2: memref<1x128xf32, #tpu.memory_space<vmem>>, %arg3: memref<128x128xf32, #tpu.memory_space<vmem>>, %arg4: memref<1x128xf32, #tpu.memory_space<vmem>>, %arg5: memref<8x128xf32, #tpu.memory_space<vmem>>) attributes {dimension_semantics = [], scalar_prefetch = 0 : i64, scratch_operands = 0 : i64, tpu.core_type = #tpu.core_type<tc>} {
    %c0 = arith.constant 0 : index
    %c0_0 = arith.constant 0 : index
    %0 = vector.load %arg0[%c0, %c0_0] : memref<8x800xf32, #tpu.memory_space<vmem>>, vector<8x800xf32>
    %c0_1 = arith.constant 0 : index
    %c0_2 = arith.constant 0 : index
    %1 = vector.load %arg1[%c0_1, %c0_2] : memref<800x128xf32, #tpu.memory_space<vmem>>, vector<800x128xf32>
    %cst = arith.constant dense<0.000000e+00> : vector<8x128xf32>
    %2 = tpu.matmul %0, %1, %cst {dimension_numbers = #tpu.dot_dimension_numbers<[1], [0], [0], [1], [0, 0, 1, 1], [], []>} : vector<8x800xf32>, vector<800x128xf32>, vector<8x128xf32> -> vector<8x128xf32>
    %c0_3 = arith.constant 0 : index
    %c0_4 = arith.constant 0 : index
    %3 = vector.load %arg2[%c0_3, %c0_4] : memref<1x128xf32, #tpu.memory_space<vmem>>, vector<1x128xf32>
    %4 = vector.broadcast %3 : vector<1x128xf32> to vector<8x128xf32>
    %5 = arith.addf %2, %4 : vector<8x128xf32>
    %cst_5 = arith.constant 0.000000e+00 : f32
    %6 = vector.broadcast %cst_5 : f32 to vector<8x128xf32>
    %7 = arith.maximumf %5, %6 : vector<8x128xf32>
    %c0_6 = arith.constant 0 : index
    %c0_7 = arith.constant 0 : index
    %8 = vector.load %arg3[%c0_6, %c0_7] : memref<128x128xf32, #tpu.memory_space<vmem>>, vector<128x128xf32>
    %cst_8 = arith.constant dense<0.000000e+00> : vector<8x128xf32>
    %9 = tpu.matmul %7, %8, %cst_8 {dimension_numbers = #tpu.dot_dimension_numbers<[1], [0], [0], [1], [0, 0, 1, 1], [], []>} : vector<8x128xf32>, vector<128x128xf32>, vector<8x128xf32> -> vector<8x128xf32>
    %c0_9 = arith.constant 0 : index
    %c0_10 = arith.constant 0 : index
    %10 = vector.load %arg4[%c0_9, %c0_10] : memref<1x128xf32, #tpu.memory_space<vmem>>, vector<1x128xf32>
    %11 = vector.broadcast %10 : vector<1x128xf32> to vector<8x128xf32>
    %12 = arith.addf %9, %11 : vector<8x128xf32>
    %13 = tpu.iota {dimensions = array<i32: 1>} : vector<8x128xi32>
    %c64_i32 = arith.constant 64 : i32
    %14 = vector.broadcast %c64_i32 : i32 to vector<8x128xi32>
    %15 = arith.cmpi sge, %13, %14 : vector<8x128xi32>
    %c68_i32 = arith.constant 68 : i32
    %16 = vector.broadcast %c68_i32 : i32 to vector<8x128xi32>
    %17 = arith.cmpi slt, %13, %16 : vector<8x128xi32>
    %18 = arith.andi %15, %17 : vector<8x128xi1>
    %cst_11 = arith.constant -3.000000e+01 : f32
    %cst_12 = arith.constant 3.000000e+01 : f32
    %19 = vector.broadcast %cst_11 : f32 to vector<8x128xf32>
    %20 = arith.maximumf %19, %12 : vector<8x128xf32>
    %21 = vector.broadcast %cst_12 : f32 to vector<8x128xf32>
    %22 = arith.minimumf %21, %20 : vector<8x128xf32>
    %cst_13 = arith.constant 0.000000e+00 : f32
    %23 = vector.broadcast %cst_13 : f32 to vector<8x128xf32>
    %24 = arith.subf %23, %22 : vector<8x128xf32>
    %25 = math.exp %24 : vector<8x128xf32>
    %cst_14 = arith.constant 1.000000e+00 : f32
    %26 = vector.broadcast %cst_14 : f32 to vector<8x128xf32>
    %27 = arith.addf %26, %25 : vector<8x128xf32>
    %28 = tpu.reciprocal %27 {approx = true} : vector<8x128xf32> -> vector<8x128xf32>
    %29 = arith.select %18, %28, %7 : vector<8x128xi1>, vector<8x128xf32>
    %c0_15 = arith.constant 0 : index
    %c0_16 = arith.constant 0 : index
    %30 = vector.load %arg5[%c0_15, %c0_16] : memref<8x128xf32, #tpu.memory_space<vmem>>, vector<8x128xf32>
    tpu.vector_store %arg5[%c0_15, %c0_16], %29 {strides = array<i32>} : memref<8x128xf32, #tpu.memory_space<vmem>>, vector<8x128xf32>,
    return
  }
}

</mosaic_0001>

<llo_original>
// kernel: tpu_custom_call.1
$region0: #{tpu_custom_call.1}
  #allocation0 [shape = 'u32[]', space=smem, size = 0x4, offset = 0x4, fixed_abs, tag = 'smem constant byte address 0x4 - core index']
  #allocation1 [shape = 'u32[144,128]{1,0:T(1,128)}', space=vmem, size = 0x12000, scoped, tag = 'internal scratch']
  %s0 = inlined_call_operand.hbm [shape: f32[8,800], index: 0, kind: input, shape index: {}]
  %s1 = inlined_call_operand.hbm [shape: f32[800,128], index: 1, kind: input, shape index: {}]
  %s2 = inlined_call_operand.vmem [shape: f32[1,128], index: 2, kind: input, shape index: {}]
  %s3 = inlined_call_operand.hbm [shape: f32[128,128], index: 3, kind: input, shape index: {}]
  %s4 = inlined_call_operand.vmem [shape: f32[1,128], index: 4, kind: input, shape index: {}]
  %s5 = inlined_call_operand.hbm [shape: f32[8,128], index: 5, kind: output, shape index: {}]
  %s6 = sld [smem:[#allocation0]]
  $region42: #{tpu_custom_call.1} parent=0
    _
  %s8 = ssub.s32 1, %s6
  %s9 = scalar_select 0, %s8, %s6
  $region1: #{tpu_custom_call.1} parent=0
    #allocation2 [shape = 'u8[28672]{0}', space=vmem, size = 0x7000, scoped, tag = 'input window, operand 0, single buffered']
    #allocation3 [shape = 's32[1]{0}', space=sflag, size = 0x4, scoped, tag = 'scoped memory for tpu_custom_call.1']
    #allocation4 [shape = 's32[1]{0}', space=sflag, size = 0x4, scoped, tag = 'scoped memory for tpu_custom_call.1']
    #allocation5 [shape = 'u8[409600]{0}', space=vmem, size = 0x64000, scoped, tag = 'input window, operand 1, single buffered']
    #allocation6 [shape = 's32[1]{0}', space=sflag, size = 0x4, scoped, tag = 'scoped memory for tpu_custom_call.1']
    #allocation7 [shape = 'u8[65536]{0}', space=vmem, size = 0x10000, scoped, tag = 'input window, operand 3, single buffered']
    #allocation8 [shape = 'u8[4096]{0}', space=vmem, size = 0x1000, scoped, tag = 'output window, operand 0, single buffered']
    %10 = vsyncpa [#allocation3], 0
    %11 = vsyncpa [#allocation6], 0
    %12 = vsyncpa [#allocation4], 0
    // Predicated region
    $region2: #{tpu_custom_call.1} parent=1 // pred_check
      _
    $region3: #{tpu_custom_call.1} parent=1 // pred_check_branch
      %14 = sbr.rel (0) target = $region5
    $region4: #{tpu_custom_call.1} parent=1 // pred_region
      %s16 = ssub.s32 896, 896
      %17 = vsyncadd [#allocation3], %s16
      %s19 = sshll.u32 [#allocation2], 4
      %s20 = int_to_ptr.vmem [resolvable:$true] %s19
      %22 = dma.hbm_to_vmem [thread:$0]  %s0, 896, %s20, [#allocation3]
    $region5: #{tpu_custom_call.1} parent=1 // pred_fallthru
      _
    // Predicated region
    $region6: #{tpu_custom_call.1} parent=1 // pred_check
      _
    $region7: #{tpu_custom_call.1} parent=1 // pred_check_branch
      %24 = sbr.rel (0) target = $region9
    $region8: #{tpu_custom_call.1} parent=1 // pred_region
      %s26 = ssub.s32 12800, 12800
      %27 = vsyncadd [#allocation6], %s26
      %s28 = sshll.u32 [#allocation5], 4
      %s29 = int_to_ptr.vmem [resolvable:$true] %s28
      %34 = dma.hbm_to_vmem [thread:$0]  %s1, 12800, %s29, [#allocation6], 128, 128, 8
    $region9: #{tpu_custom_call.1} parent=1 // pred_fallthru
      _
    // Predicated region
    $region10: #{tpu_custom_call.1} parent=1 // pred_check
      _
    $region11: #{tpu_custom_call.1} parent=1 // pred_check_branch
      %36 = sbr.rel (0) target = $region13
    $region12: #{tpu_custom_call.1} parent=1 // pred_region
      _
    $region13: #{tpu_custom_call.1} parent=1 // pred_fallthru
      _
    // Predicated region
    $region14: #{tpu_custom_call.1} parent=1 // pred_check
      _
    $region15: #{tpu_custom_call.1} parent=1 // pred_check_branch
      %38 = sbr.rel (0) target = $region17
    $region16: #{tpu_custom_call.1} parent=1 // pred_region
      %s40 = ssub.s32 2048, 2048
      %41 = vsyncadd [#allocation6], %s40
      %s42 = sshll.u32 [#allocation7], 4
      %s43 = int_to_ptr.vmem [resolvable:$true] %s42
      %48 = dma.hbm_to_vmem [thread:$0]  %s3, 2048, %s43, [#allocation6], 128, 128, 8
    $region17: #{tpu_custom_call.1} parent=1 // pred_fallthru
      _
    // Predicated region
    $region18: #{tpu_custom_call.1} parent=1 // pred_check
      _
    $region19: #{tpu_custom_call.1} parent=1 // pred_check_branch
      %50 = sbr.rel (0) target = $region21
    $region20: #{tpu_custom_call.1} parent=1 // pred_region
      _
    $region21: #{tpu_custom_call.1} parent=1 // pred_fallthru
      _
    // Predicated region
    $region22: #{tpu_custom_call.1} parent=1 // pred_check
      _
    $region23: #{tpu_custom_call.1} parent=1 // pred_check_branch
      %52 = sbr.rel (0) target = $region25
    $region24: #{tpu_custom_call.1} parent=1 // pred_region
      %53 = dma.done [#allocation3], 896
    $region25: #{tpu_custom_call.1} parent=1 // pred_fallthru
      _
    // Predicated region
    $region26: #{tpu_custom_call.1} parent=1 // pred_check
      _
    $region27: #{tpu_custom_call.1} parent=1 // pred_check_branch
      %55 = sbr.rel (0) target = $region29
    $region28: #{tpu_custom_call.1} parent=1 // pred_region
      %56 = dma.done [#allocation6], 12800
    $region29: #{tpu_custom_call.1} parent=1 // pred_fallthru
      _
    // Predicated region
    $region30: #{tpu_custom_call.1} parent=1 // pred_check
      _
    $region31: #{tpu_custom_call.1} parent=1 // pred_check_branch
      %58 = sbr.rel (0) target = $region33
    $region32: #{tpu_custom_call.1} parent=1 // pred_region
      %59 = dma.done [#allocation6], 2048
    $region33: #{tpu_custom_call.1} parent=1 // pred_fallthru
      _
    %v60 = vld [vmem:[#allocation2] sm:$0xff]
    %v61 = vld [vmem:[#allocation2 + $0x8] sm:$0xff]
    %v62 = vld [vmem:[#allocation2 + $0x10] sm:$0xff]
    %v63 = vld [vmem:[#allocation2 + $0x18] sm:$0xff]
    %v64 = vld [vmem:[#allocation2 + $0x20] sm:$0xff]
    %v65 = vld [vmem:[#allocation2 + $0x28] sm:$0xff]
    %v66 = vld [vmem:[#allocation2 + $0x30] sm:$0xff]
    %v67 = vld [vmem:[#allocation5] sm:$0xff]
    %v68 = vld [vmem:[#allocation5 + $0x8] sm:$0xff]
    %v69 = vld [vmem:[#allocation5 + $0x10] sm:$0xff]
    %v70 = vld [vmem:[#allocation5 + $0x18] sm:$0xff]
    %v71 = vld [vmem:[#allocation5 + $0x20] sm:$0xff]
    %v72 = vld [vmem:[#allocation5 + $0x28] sm:$0xff]
    %v73 = vld [vmem:[#allocation5 + $0x30] sm:$0xff]
    %v74 = vld [vmem:[#allocation5 + $0x38] sm:$0xff]
    %v75 = vld [vmem:[#allocation5 + $0x40] sm:$0xff]
    %v76 = vld [vmem:[#allocation5 + $0x48] sm:$0xff]
    %v77 = vld [vmem:[#allocation5 + $0x50] sm:$0xff]
    %v78 = vld [vmem:[#allocation5 + $0x58] sm:$0xff]
    %v79 = vld [vmem:[#allocation5 + $0x60] sm:$0xff]
    %v80 = vld [vmem:[#allocation5 + $0x68] sm:$0xff]
    %v81 = vld [vmem:[#allocation5 + $0x70] sm:$0xff]
    %v82 = vld [vmem:[#allocation5 + $0x78] sm:$0xff]
    %v83 = vld [vmem:[#allocation5 + $0x80] sm:$0xff]
    %v84 = vld [vmem:[#allocation5 + $0x88] sm:$0xff]
    %v85 = vld [vmem:[#allocation5 + $0x90] sm:$0xff]
    %v86 = vld [vmem:[#allocation5 + $0x98] sm:$0xff]
    %v87 = vld [vmem:[#allocation5 + $0xa0] sm:$0xff]
    %v88 = vld [vmem:[#allocation5 + $0xa8] sm:$0xff]
    %v89 = vld [vmem:[#allocation5 + $0xb0] sm:$0xff]
    %v90 = vld [vmem:[#allocation5 + $0xb8] sm:$0xff]
    %v91 = vld [vmem:[#allocation5 + $0xc0] sm:$0xff]
    %v92 = vld [vmem:[#allocation5 + $0xc8] sm:$0xff]
    %v93 = vld [vmem:[#allocation5 + $0xd0] sm:$0xff]
    %v94 = vld [vmem:[#allocation5 + $0xd8] sm:$0xff]
    %v95 = vld [vmem:[#allocation5 + $0xe0] sm:$0xff]
    %v96 = vld [vmem:[#allocation5 + $0xe8] sm:$0xff]
    %v97 = vld [vmem:[#allocation5 + $0xf0] sm:$0xff]
    %v98 = vld [vmem:[#allocation5 + $0xf8] sm:$0xff]
    %v99 = vld [vmem:[#allocation5 + $0x100] sm:$0xff]
    %v100 = vld [vmem:[#allocation5 + $0x108] sm:$0xff]
    %v101 = vld [vmem:[#allocation5 + $0x110] sm:$0xff]
    %v102 = vld [vmem:[#allocation5 + $0x118] sm:$0xff]
    %v103 = vld [vmem:[#allocation5 + $0x120] sm:$0xff]
    %v104 = vld [vmem:[#allocation5 + $0x128] sm:$0xff]
    %v105 = vld [vmem:[#allocation5 + $0x130] sm:$0xff]
    %v106 = vld [vmem:[#allocation5 + $0x138] sm:$0xff]
    %v107 = vld [vmem:[#allocation5 + $0x140] sm:$0xff]
    %v108 = vld [vmem:[#allocation5 + $0x148] sm:$0xff]
    %v109 = vld [vmem:[#allocation5 + $0x150] sm:$0xff]
    %v110 = vld [vmem:[#allocation5 + $0x158] sm:$0xff]
    %v111 = vld [vmem:[#allocation5 + $0x160] sm:$0xff]
    %v112 = vld [vmem:[#allocation5 + $0x168] sm:$0xff]
    %v113 = vld [vmem:[#allocation5 + $0x170] sm:$0xff]
    %v114 = vld [vmem:[#allocation5 + $0x178] sm:$0xff]
    %v115 = vld [vmem:[#allocation5 + $0x180] sm:$0xff]
    %v116 = vld [vmem:[#allocation5 + $0x188] sm:$0xff]
    %v117 = vld [vmem:[#allocation5 + $0x190] sm:$0xff]
    %v118 = vld [vmem:[#allocation5 + $0x198] sm:$0xff]
    %v119 = vld [vmem:[#allocation5 + $0x1a0] sm:$0xff]
    %v120 = vld [vmem:[#allocation5 + $0x1a8] sm:$0xff]
    %v121 = vld [vmem:[#allocation5 + $0x1b0] sm:$0xff]
    %v122 = vld [vmem:[#allocation5 + $0x1b8] sm:$0xff]
    %v123 = vld [vmem:[#allocation5 + $0x1c0] sm:$0xff]
    %v124 = vld [vmem:[#allocation5 + $0x1c8] sm:$0xff]
    %v125 = vld [vmem:[#allocation5 + $0x1d0] sm:$0xff]
    %v126 = vld [vmem:[#allocation5 + $0x1d8] sm:$0xff]
    %v127 = vld [vmem:[#allocation5 + $0x1e0] sm:$0xff]
    %v128 = vld [vmem:[#allocation5 + $0x1e8] sm:$0xff]
    %v129 = vld [vmem:[#allocation5 + $0x1f0] sm:$0xff]
    %v130 = vld [vmem:[#allocation5 + $0x1f8] sm:$0xff]
    %v131 = vld [vmem:[#allocation5 + $0x200] sm:$0xff]
    %v132 = vld [vmem:[#allocation5 + $0x208] sm:$0xff]
    %v133 = vld [vmem:[#allocation5 + $0x210] sm:$0xff]
    %v134 = vld [vmem:[#allocation5 + $0x218] sm:$0xff]
    %v135 = vld [vmem:[#allocation5 + $0x220] sm:$0xff]
    %v136 = vld [vmem:[#allocation5 + $0x228] sm:$0xff]
    %v137 = vld [vmem:[#allocation5 + $0x230] sm:$0xff]
    %v138 = vld [vmem:[#allocation5 + $0x238] sm:$0xff]
    %v139 = vld [vmem:[#allocation5 + $0x240] sm:$0xff]
    %v140 = vld [vmem:[#allocation5 + $0x248] sm:$0xff]
    %v141 = vld [vmem:[#allocation5 + $0x250] sm:$0xff]
    %v142 = vld [vmem:[#allocation5 + $0x258] sm:$0xff]
    %v143 = vld [vmem:[#allocation5 + $0x260] sm:$0xff]
    %v144 = vld [vmem:[#allocation5 + $0x268] sm:$0xff]
    %v145 = vld [vmem:[#allocation5 + $0x270] sm:$0xff]
    %v146 = vld [vmem:[#allocation5 + $0x278] sm:$0xff]
    %v147 = vld [vmem:[#allocation5 + $0x280] sm:$0xff]
    %v148 = vld [vmem:[#allocation5 + $0x288] sm:$0xff]
    %v149 = vld [vmem:[#allocation5 + $0x290] sm:$0xff]
    %v150 = vld [vmem:[#allocation5 + $0x298] sm:$0xff]
    %v151 = vld [vmem:[#allocation5 + $0x2a0] sm:$0xff]
    %v152 = vld [vmem:[#allocation5 + $0x2a8] sm:$0xff]
    %v153 = vld [vmem:[#allocation5 + $0x2b0] sm:$0xff]
    %v154 = vld [vmem:[#allocation5 + $0x2b8] sm:$0xff]
    %v155 = vld [vmem:[#allocation5 + $0x2c0] sm:$0xff]
    %v156 = vld [vmem:[#allocation5 + $0x2c8] sm:$0xff]
    %v157 = vld [vmem:[#allocation5 + $0x2d0] sm:$0xff]
    %v158 = vld [vmem:[#allocation5 + $0x2d8] sm:$0xff]
    %v159 = vld [vmem:[#allocation5 + $0x2e0] sm:$0xff]
    %v160 = vld [vmem:[#allocation5 + $0x2e8] sm:$0xff]
    %v161 = vld [vmem:[#allocation5 + $0x2f0] sm:$0xff]
    %v162 = vld [vmem:[#allocation5 + $0x2f8] sm:$0xff]
    %v163 = vld [vmem:[#allocation5 + $0x300] sm:$0xff]
    %v164 = vld [vmem:[#allocation5 + $0x308] sm:$0xff]
    %v165 = vld [vmem:[#allocation5 + $0x310] sm:$0xff]
    %v166 = vld [vmem:[#allocation5 + $0x318] sm:$0xff]
    %v167 = vld [vmem:[%s2] sm:$0x1]
    %v169 = vlaneseq
    %v170 = vshrl.u32 %v169, 7
    %v171 = vsub.s32 0, %v170
    %v172 = vrot.slane %v167, %v171
    %vm174 = vcmask 261120
    %v176 = vsel %vm174, %v66, 0
    %178 = vmatprep.subr.mxu0 0.0
    %179 = vmatpush1.msra.mxu0 %v82
    %180 = vmatprep.subr.mxu0 0.0
    %181 = vmatpush1.msra.mxu0 %v81
    %182 = vmatprep.subr.mxu0 0.0
    %183 = vmatpush1.msra.mxu0 %v80
    %184 = vmatprep.subr.mxu0 0.0
    %185 = vmatpush1.msra.mxu0 %v79
    %186 = vmatprep.subr.mxu0 0.0
    %187 = vmatpush1.msra.mxu0 %v78
    %188 = vmatprep.subr.mxu0 0.0
    %189 = vmatpush1.msra.mxu0 %v77
    %190 = vmatprep.subr.mxu0 0.0
    %191 = vmatpush1.msra.mxu0 %v76
    %192 = vmatprep.subr.mxu0 0.0
    %193 = vmatpush1.msra.mxu0 %v75
    %194 = vmatprep.subr.mxu0 0.0
    %195 = vmatpush1.msra.mxu0 %v74
    %196 = vmatprep.subr.mxu0 0.0
    %197 = vmatpush1.msra.mxu0 %v73
    %198 = vmatprep.subr.mxu0 0.0
    %199 = vmatpush1.msra.mxu0 %v72
    %200 = vmatprep.subr.mxu0 0.0
    %201 = vmatpush1.msra.mxu0 %v71
    %202 = vmatprep.subr.mxu0 0.0
    %203 = vmatpush1.msra.mxu0 %v70
    %204 = vmatprep.subr.mxu0 0.0
    %205 = vmatpush1.msra.mxu0 %v69
    %206 = vmatprep.subr.mxu0 0.0
    %207 = vmatpush1.msra.mxu0 %v68
    %208 = vmatprep.subr.mxu0 0.0
    %209 = vmatpush1.msra.mxu0 %v67
    %210 = vmatprep.subr.mxu0 0.0
    %211 = vmatpush2.msra.mxu0 %v98
    %212 = vmatprep.subr.mxu0 0.0
    %213 = vmatpush2.msra.mxu0 %v97
    %214 = vmatprep.subr.mxu0 0.0
    %215 = vmatpush2.msra.mxu0 %v96
    %216 = vmatprep.subr.mxu0 0.0
    %217 = vmatpush2.msra.mxu0 %v95
    %218 = vmatprep.subr.mxu0 0.0
    %219 = vmatpush2.msra.mxu0 %v94
    %220 = vmatprep.subr.mxu0 0.0
    %221 = vmatpush2.msra.mxu0 %v93
    %222 = vmatprep.subr.mxu0 0.0
    %223 = vmatpush2.msra.mxu0 %v92
    %224 = vmatprep.subr.mxu0 0.0
    %225 = vmatpush2.msra.mxu0 %v91
    %226 = vmatprep.subr.mxu0 0.0
    %227 = vmatpush2.msra.mxu0 %v90
    %228 = vmatprep.subr.mxu0 0.0
    %229 = vmatpush2.msra.mxu0 %v89
    %230 = vmatprep.subr.mxu0 0.0
    %231 = vmatpush2.msra.mxu0 %v88
    %232 = vmatprep.subr.mxu0 0.0
    %233 = vmatpush2.msra.mxu0 %v87
    %234 = vmatprep.subr.mxu0 0.0
    %235 = vmatpush2.msra.mxu0 %v86
    %236 = vmatprep.subr.mxu0 0.0
    %237 = vmatpush2.msra.mxu0 %v85
    %238 = vmatprep.subr.mxu0 0.0
    %239 = vmatpush2.msra.mxu0 %v84
    %240 = vmatprep.subr.mxu0 0.0
    %241 = vmatpush2.msra.mxu0 %v83
    %242 = vmatprep.mubr.f32.mxu0 %v61
    %243 = vmatmul.mubr.f32.gmra.mxu0 %v60
    %v244 = vpop.f32.mrf.mxu0
    %v245 = vadd.f32 %v172, %v244
    %v246 = vpop.f32.mrf.mxu0
    %247 = vdwg.mxu0
    %248 = vmatprep.subr.mxu0 0.0
    %249 = vmatpush1.msra.mxu0 %v114
    %250 = vmatprep.subr.mxu0 0.0
    %251 = vmatpush1.msra.mxu0 %v113
    %252 = vmatprep.subr.mxu0 0.0
    %253 = vmatpush1.msra.mxu0 %v112
    %254 = vmatprep.subr.mxu0 0.0
    %255 = vmatpush1.msra.mxu0 %v111
    %256 = vmatprep.subr.mxu0 0.0
    %257 = vmatpush1.msra.mxu0 %v110
    %258 = vmatprep.subr.mxu0 0.0
    %259 = vmatpush1.msra.mxu0 %v109
    %260 = vmatprep.subr.mxu0 0.0
    %261 = vmatpush1.msra.mxu0 %v108
    %262 = vmatprep.subr.mxu0 0.0
    %263 = vmatpush1.msra.mxu0 %v107
    %264 = vmatprep.subr.mxu0 0.0
    %265 = vmatpush1.msra.mxu0 %v106
    %266 = vmatprep.subr.mxu0 0.0
    %267 = vmatpush1.msra.mxu0 %v105
    %268 = vmatprep.subr.mxu0 0.0
    %269 = vmatpush1.msra.mxu0 %v104
    %270 = vmatprep.subr.mxu0 0.0
    %271 = vmatpush1.msra.mxu0 %v103
    %272 = vmatprep.subr.mxu0 0.0
    %273 = vmatpush1.msra.mxu0 %v102
    %274 = vmatprep.subr.mxu0 0.0
    %275 = vmatpush1.msra.mxu0 %v101
    %276 = vmatprep.subr.mxu0 0.0
    %277 = vmatpush1.msra.mxu0 %v100
    %278 = vmatprep.subr.mxu0 0.0
    %279 = vmatpush1.msra.mxu0 %v99
    %280 = vmatprep.subr.mxu0 0.0
    %281 = vmatpush2.msra.mxu0 %v130
    %282 = vmatprep.subr.mxu0 0.0
    %283 = vmatpush2.msra.mxu0 %v129
    %284 = vmatprep.subr.mxu0 0.0
    %285 = vmatpush2.msra.mxu0 %v128
    %286 = vmatprep.subr.mxu0 0.0
    %287 = vmatpush2.msra.mxu0 %v127
    %288 = vmatprep.subr.mxu0 0.0
    %289 = vmatpush2.msra.mxu0 %v126
    %290 = vmatprep.subr.mxu0 0.0
    %291 = vmatpush2.msra.mxu0 %v125
    %292 = vmatprep.subr.mxu0 0.0
    %293 = vmatpush2.msra.mxu0 %v124
    %294 = vmatprep.subr.mxu0 0.0
    %295 = vmatpush2.msra.mxu0 %v123
    %296 = vmatprep.subr.mxu0 0.0
    %297 = vmatpush2.msra.mxu0 %v122
    %298 = vmatprep.subr.mxu0 0.0
    %299 = vmatpush2.msra.mxu0 %v121
    %300 = vmatprep.subr.mxu0 0.0
    %301 = vmatpush2.msra.mxu0 %v120
    %302 = vmatprep.subr.mxu0 0.0
    %303 = vmatpush2.msra.mxu0 %v119
    %304 = vmatprep.subr.mxu0 0.0
    %305 = vmatpush2.msra.mxu0 %v118
    %306 = vmatprep.subr.mxu0 0.0
    %307 = vmatpush2.msra.mxu0 %v117
    %308 = vmatprep.subr.mxu0 0.0
    %309 = vmatpush2.msra.mxu0 %v116
    %310 = vmatprep.subr.mxu0 0.0
    %311 = vmatpush2.msra.mxu0 %v115
    %312 = vmatprep.mubr.f32.mxu0 %v63
    %313 = vmatmul.mubr.f32.gmra.mxu0 %v62
    %v314 = vpop.f32.mrf.mxu0
    %v315 = vadd.f32 %v245, %v314
    %v316 = vpop.f32.mrf.mxu0
    %317 = vdwg.mxu0
    %318 = vmatprep.subr.mxu0 0.0
    %319 = vmatpush1.msra.mxu0 %v146
    %320 = vmatprep.subr.mxu0 0.0
    %321 = vmatpush1.msra.mxu0 %v145
    %322 = vmatprep.subr.mxu0 0.0
    %323 = vmatpush1.msra.mxu0 %v144
    %324 = vmatprep.subr.mxu0 0.0
    %325 = vmatpush1.msra.mxu0 %v143
    %326 = vmatprep.subr.mxu0 0.0
    %327 = vmatpush1.msra.mxu0 %v142
    %328 = vmatprep.subr.mxu0 0.0
    %329 = vmatpush1.msra.mxu0 %v141
    %330 = vmatprep.subr.mxu0 0.0
    %331 = vmatpush1.msra.mxu0 %v140
    %332 = vmatprep.subr.mxu0 0.0
    %333 = vmatpush1.msra.mxu0 %v139
    %334 = vmatprep.subr.mxu0 0.0
    %335 = vmatpush1.msra.mxu0 %v138
    %336 = vmatprep.subr.mxu0 0.0
    %337 = vmatpush1.msra.mxu0 %v137
    %338 = vmatprep.subr.mxu0 0.0
    %339 = vmatpush1.msra.mxu0 %v136
    %340 = vmatprep.subr.mxu0 0.0
    %341 = vmatpush1.msra.mxu0 %v135
    %342 = vmatprep.subr.mxu0 0.0
    %343 = vmatpush1.msra.mxu0 %v134
    %344 = vmatprep.subr.mxu0 0.0
    %345 = vmatpush1.msra.mxu0 %v133
    %346 = vmatprep.subr.mxu0 0.0
    %347 = vmatpush1.msra.mxu0 %v132
    %348 = vmatprep.subr.mxu0 0.0
    %349 = vmatpush1.msra.mxu0 %v131
    %350 = vmatprep.subr.mxu0 0.0
    %351 = vmatpush2.msra.mxu0 %v162
    %352 = vmatprep.subr.mxu0 0.0
    %353 = vmatpush2.msra.mxu0 %v161
    %354 = vmatprep.subr.mxu0 0.0
    %355 = vmatpush2.msra.mxu0 %v160
    %356 = vmatprep.subr.mxu0 0.0
    %357 = vmatpush2.msra.mxu0 %v159
    %358 = vmatprep.subr.mxu0 0.0
    %359 = vmatpush2.msra.mxu0 %v158
    %360 = vmatprep.subr.mxu0 0.0
    %361 = vmatpush2.msra.mxu0 %v157
    %362 = vmatprep.subr.mxu0 0.0
    %363 = vmatpush2.msra.mxu0 %v156
    %364 = vmatprep.subr.mxu0 0.0
    %365 = vmatpush2.msra.mxu0 %v155
    %366 = vmatprep.subr.mxu0 0.0
    %367 = vmatpush2.msra.mxu0 %v154
    %368 = vmatprep.subr.mxu0 0.0
    %369 = vmatpush2.msra.mxu0 %v153
    %370 = vmatprep.subr.mxu0 0.0
    %371 = vmatpush2.msra.mxu0 %v152
    %372 = vmatprep.subr.mxu0 0.0
    %373 = vmatpush2.msra.mxu0 %v151
    %374 = vmatprep.subr.mxu0 0.0
    %375 = vmatpush2.msra.mxu0 %v150
    %376 = vmatprep.subr.mxu0 0.0
    %377 = vmatpush2.msra.mxu0 %v149
    %378 = vmatprep.subr.mxu0 0.0
    %379 = vmatpush2.msra.mxu0 %v148
    %380 = vmatprep.subr.mxu0 0.0
    %381 = vmatpush2.msra.mxu0 %v147
    %382 = vmatprep.mubr.f32.mxu0 %v65
    %383 = vmatmul.mubr.f32.gmra.mxu0 %v64
    %v384 = vpop.f32.mrf.mxu0
    %v385 = vadd.f32 %v315, %v384
    %v386 = vpop.f32.mrf.mxu0
    %387 = vdwg.mxu0
    %388 = vmatprep.subr.mxu0 0.0
    %389 = vmatpush1.msra.mxu0 0.0
    %390 = vmatprep.subr.mxu0 0.0
    %391 = vmatpush1.msra.mxu0 0.0
    %392 = vmatprep.subr.mxu0 0.0
    %393 = vmatpush1.msra.mxu0 0.0
    %394 = vmatprep.subr.mxu0 0.0
    %395 = vmatpush1.msra.mxu0 0.0
    %396 = vmatprep.subr.mxu0 0.0
    %397 = vmatpush1.msra.mxu0 0.0
    %398 = vmatprep.subr.mxu0 0.0
    %399 = vmatpush1.msra.mxu0 0.0
    %400 = vmatprep.subr.mxu0 0.0
    %401 = vmatpush1.msra.mxu0 0.0
    %402 = vmatprep.subr.mxu0 0.0
    %403 = vmatpush1.msra.mxu0 0.0
    %404 = vmatprep.subr.mxu0 0.0
    %405 = vmatpush1.msra.mxu0 0.0
    %406 = vmatprep.subr.mxu0 0.0
    %407 = vmatpush1.msra.mxu0 0.0
    %408 = vmatprep.subr.mxu0 0.0
    %409 = vmatpush1.msra.mxu0 0.0
    %410 = vmatprep.subr.mxu0 0.0
    %411 = vmatpush1.msra.mxu0 0.0
    %412 = vmatprep.subr.mxu0 0.0
    %413 = vmatpush1.msra.mxu0 %v166
    %414 = vmatprep.subr.mxu0 0.0
    %415 = vmatpush1.msra.mxu0 %v165
    %416 = vmatprep.subr.mxu0 0.0
    %417 = vmatpush1.msra.mxu0 %v164
    %418 = vmatprep.subr.mxu0 0.0
    %419 = vmatpush1.msra.mxu0 %v163
    %420 = vmatprep.subr.mxu0 0.0
    %421 = vmatpush2.msra.mxu0 0.0
    %422 = vmatprep.subr.mxu0 0.0
    %423 = vmatpush2.msra.mxu0 0.0
    %424 = vmatprep.subr.mxu0 0.0
    %425 = vmatpush2.msra.mxu0 0.0
    %426 = vmatprep.subr.mxu0 0.0
    %427 = vmatpush2.msra.mxu0 0.0
    %428 = vmatprep.subr.mxu0 0.0
    %429 = vmatpush2.msra.mxu0 0.0
    %430 = vmatprep.subr.mxu0 0.0
    %431 = vmatpush2.msra.mxu0 0.0
    %432 = vmatprep.subr.mxu0 0.0
    %433 = vmatpush2.msra.mxu0 0.0
    %434 = vmatprep.subr.mxu0 0.0
    %435 = vmatpush2.msra.mxu0 0.0
    %436 = vmatprep.subr.mxu0 0.0
    %437 = vmatpush2.msra.mxu0 0.0
    %438 = vmatprep.subr.mxu0 0.0
    %439 = vmatpush2.msra.mxu0 0.0
    %440 = vmatprep.subr.mxu0 0.0
    %441 = vmatpush2.msra.mxu0 0.0
    %442 = vmatprep.subr.mxu0 0.0
    %443 = vmatpush2.msra.mxu0 0.0
    %444 = vmatprep.subr.mxu0 0.0
    %445 = vmatpush2.msra.mxu0 0.0
    %446 = vmatprep.subr.mxu0 0.0
    %447 = vmatpush2.msra.mxu0 0.0
    %448 = vmatprep.subr.mxu0 0.0
    %449 = vmatpush2.msra.mxu0 0.0
    %450 = vmatprep.subr.mxu0 0.0
    %451 = vmatpush2.msra.mxu0 0.0
    %452 = vmatprep.mubr.f32.mxu0 0.0
    %453 = vmatmul.mubr.f32.gmra.mxu0 %v176
    %v454 = vpop.f32.mrf.mxu0
    %v455 = vadd.f32 %v385, %v454
    %v456 = vpop.f32.mrf.mxu0
    %457 = vdwg.mxu0
    %v458 = vmax.f32 %v455, 0.0
    %v459 = vld [vmem:[#allocation7] sm:$0xff]
    %v460 = vld [vmem:[#allocation7 + $0x8] sm:$0xff]
    %v461 = vld [vmem:[#allocation7 + $0x10] sm:$0xff]
    %v462 = vld [vmem:[#allocation7 + $0x18] sm:$0xff]
    %v463 = vld [vmem:[#allocation7 + $0x20] sm:$0xff]
    %v464 = vld [vmem:[#allocation7 + $0x28] sm:$0xff]
    %v465 = vld [vmem:[#allocation7 + $0x30] sm:$0xff]
    %v466 = vld [vmem:[#allocation7 + $0x38] sm:$0xff]
    %v467 = vld [vmem:[#allocation7 + $0x40] sm:$0xff]
    %v468 = vld [vmem:[#allocation7 + $0x48] sm:$0xff]
    %v469 = vld [vmem:[#allocation7 + $0x50] sm:$0xff]
    %v470 = vld [vmem:[#allocation7 + $0x58] sm:$0xff]
    %v471 = vld [vmem:[#allocation7 + $0x60] sm:$0xff]
    %v472 = vld [vmem:[#allocation7 + $0x68] sm:$0xff]
    %v473 = vld [vmem:[#allocation7 + $0x70] sm:$0xff]
    %v474 = vld [vmem:[#allocation7 + $0x78] sm:$0xff]
    %v475 = vld [vmem:[%s4] sm:$0x1]
    %v477 = vlaneseq
    %v478 = vshrl.u32 %v477, 7
    %v479 = vsub.s32 0, %v478
    %v480 = vrot.slane %v475, %v479
    %482 = vmatprep.subr.mxu0 0.0
    %483 = vmatpush1.msra.mxu0 %v474
    %484 = vmatprep.subr.mxu0 0.0
    %485 = vmatpush1.msra.mxu0 %v473
    %486 = vmatprep.subr.mxu0 0.0
    %487 = vmatpush1.msra.mxu0 %v472
    %488 = vmatprep.subr.mxu0 0.0
    %489 = vmatpush1.msra.mxu0 %v471
    %490 = vmatprep.subr.mxu0 0.0
    %491 = vmatpush1.msra.mxu0 %v470
    %492 = vmatprep.subr.mxu0 0.0
    %493 = vmatpush1.msra.mxu0 %v469
    %494 = vmatprep.subr.mxu0 0.0
    %495 = vmatpush1.msra.mxu0 %v468
    %496 = vmatprep.subr.mxu0 0.0
    %497 = vmatpush1.msra.mxu0 %v467
    %498 = vmatprep.subr.mxu0 0.0
    %499 = vmatpush1.msra.mxu0 %v466
    %500 = vmatprep.subr.mxu0 0.0
    %501 = vmatpush1.msra.mxu0 %v465
    %502 = vmatprep.subr.mxu0 0.0
    %503 = vmatpush1.msra.mxu0 %v464
    %504 = vmatprep.subr.mxu0 0.0
    %505 = vmatpush1.msra.mxu0 %v463
    %506 = vmatprep.subr.mxu0 0.0
    %507 = vmatpush1.msra.mxu0 %v462
    %508 = vmatprep.subr.mxu0 0.0
    %509 = vmatpush1.msra.mxu0 %v461
    %510 = vmatprep.subr.mxu0 0.0
    %511 = vmatpush1.msra.mxu0 %v460
    %512 = vmatprep.subr.mxu0 0.0
    %513 = vmatpush1.msra.mxu0 %v459
    %514 = vmatprep.subr.mxu0 0.0
    %515 = vmatpush2.msra.mxu0 0.0
    %516 = vmatprep.subr.mxu0 0.0
    %517 = vmatpush2.msra.mxu0 0.0
    %518 = vmatprep.subr.mxu0 0.0
    %519 = vmatpush2.msra.mxu0 0.0
    %520 = vmatprep.subr.mxu0 0.0
    %521 = vmatpush2.msra.mxu0 0.0
    %522 = vmatprep.subr.mxu0 0.0
    %523 = vmatpush2.msra.mxu0 0.0
    %524 = vmatprep.subr.mxu0 0.0
    %525 = vmatpush2.msra.mxu0 0.0
    %526 = vmatprep.subr.mxu0 0.0
    %527 = vmatpush2.msra.mxu0 0.0
    %528 = vmatprep.subr.mxu0 0.0
    %529 = vmatpush2.msra.mxu0 0.0
    %530 = vmatprep.subr.mxu0 0.0
    %531 = vmatpush2.msra.mxu0 0.0
    %532 = vmatprep.subr.mxu0 0.0
    %533 = vmatpush2.msra.mxu0 0.0
    %534 = vmatprep.subr.mxu0 0.0
    %535 = vmatpush2.msra.mxu0 0.0
    %536 = vmatprep.subr.mxu0 0.0
    %537 = vmatpush2.msra.mxu0 0.0
    %538 = vmatprep.subr.mxu0 0.0
    %539 = vmatpush2.msra.mxu0 0.0
    %540 = vmatprep.subr.mxu0 0.0
    %541 = vmatpush2.msra.mxu0 0.0
    %542 = vmatprep.subr.mxu0 0.0
    %543 = vmatpush2.msra.mxu0 0.0
    %544 = vmatprep.subr.mxu0 0.0
    %545 = vmatpush2.msra.mxu0 0.0
    %546 = vmatprep.mubr.f32.mxu0 0.0
    %547 = vmatmul.mubr.f32.gmra.mxu0 %v458
    %v548 = vpop.f32.mrf.mxu0
    %v549 = vadd.f32 %v480, %v548
    %v550 = vpop.f32.mrf.mxu0
    %551 = vdwg.mxu0
    %v552 = vlaneseq
    %v553 = vand.u32 %v552, 127
    %vm554 = vcmp.ge.s32.totalorder %v553, 64
    %vm555 = vcmp.lt.s32.totalorder %v553, 68
    %vm556 = vmand %vm554, %vm555
    %v557 = vmax.f32 %v549, -30.0
    %v558 = vmin.f32 %v557, 30.0
    %v559 = vsub.f32 0.0, %v558
    %v560 = vmul.f32 %v559, 1.442695
    %v561 = vpow.pop %v560
    %v562 = vadd.f32 %v561, 1.0
    %v563 = vrcp.pop %v562
    %v564 = vsel %vm556, %v563, %v458
    %565 = vst [vmem:[#allocation8] sm:$0xff] %v564
    // Predicated region
    $region34: #{tpu_custom_call.1} parent=1 // pred_check
      _
    $region35: #{tpu_custom_call.1} parent=1 // pred_check_branch
      %567 = sbr.rel (0) target = $region37
    $region36: #{tpu_custom_call.1} parent=1 // pred_region
      %s569 = ssub.s32 128, 128
      %570 = vsyncadd [#allocation4], %s569
      %s572 = sshll.u32 [#allocation8], 4
      %s573 = int_to_ptr.vmem [resolvable:$true] %s572
      %575 = dma.vmem_to_hbm [thread:$0]  %s573, 128, %s5, [#allocation4]
    $region37: #{tpu_custom_call.1} parent=1 // pred_fallthru
      _
    // Predicated region
    $region38: #{tpu_custom_call.1} parent=1 // pred_check
      _
    $region39: #{tpu_custom_call.1} parent=1 // pred_check_branch
      %577 = sbr.rel (0) target = $region41
    $region40: #{tpu_custom_call.1} parent=1 // pred_region
      %578 = dma.done [#allocation4], 128
    $region41: #{tpu_custom_call.1} parent=1 // pred_fallthru
      _
    %579 = vsyncpa [#allocation3], 1
    %580 = vsyncpa [#allocation6], 1
    %581 = vsyncpa [#allocation4], 1

</llo_original>
